<compile_context>
chip_gen: v5e
topology: v5e:2x2
jax: 0.10.0
libtpu: 0.0.40
codegen_flags: <defaults>
</compile_context>

<pallas_src>
import numpy as np
import jax
import jax.numpy as jnp
from jax.experimental import pallas as pl
from jax.experimental.pallas import tpu as pltpu

_MIB = 1024 * 1024


# ---------------------------------------------------------------------------
# Generation-aware VMEM / tile sizing
# ---------------------------------------------------------------------------
def _vmem_limit_bytes() -> int:
    """Scoped-VMEM limit to request: ~16 MiB headroom below physical VMEM."""
    phys = None
    try:
        info = pltpu.get_tpu_info()
        phys = getattr(info, "vmem_capacity_bytes", None)
    except Exception:
        phys = None
    if not phys:
        phys = 64 * _MIB                      # conservative fallback (v7x floor)
    return int(max(16 * _MIB, min(phys - 16 * _MIB, 64 * _MIB)))


def _choose_tile_m(num_tokens: int, hidden: int, x_itemsize: int,
                   vmem_limit: int) -> int:
    """Largest 128-multiple token tile whose per-step VMEM footprint fits."""
    budget = int(vmem_limit * 0.75)
    padded_h = pl.cdiv(hidden, 128) * 128      # lane padding of the x block
    per_row = (2 * padded_h * x_itemsize       # double-buffered x stream
               + 2 * 8 * 4                     # double-buffered [2->8, tile_m] targets
               + 8 * 4)                        # [8, tile_m] f32 accumulator
    tile_m = (budget // per_row // 128) * 128
    padded_t = pl.cdiv(num_tokens, 128) * 128
    return int(max(128, min(tile_m, padded_t, 16384)))


# ---------------------------------------------------------------------------
# Kernel
# ---------------------------------------------------------------------------
def _make_segment_loss_kernel(total_tokens: int, tile_m: int,
                              tiles_per_core: int):
    def kernel(x_ref, t_ref, w_ref, b_ref, out_ref, acc_ref):
        # x_ref  : [tile_m, H]  token-embedding tile (f32 or bf16) — streamed
        # t_ref  : [2, tile_m]  f32 indicators (row 0 = EDU break, row 1 = EDU start)
        # w_ref  : [4, H]       fused head weights, rows [b_c0, s_c0, b_c1, s_c1]
        # b_ref  : [4, 128]     fused biases replicated along lanes
        # out_ref: [8, 128]     per-core partials (rows 0-3 used), written once
        # acc_ref: [8, tile_m]  f32 per-lane accumulator (rows 0-3 used)
        c = pl.program_id(0)
        i = pl.program_id(1)

        @pl.when(i == 0)
        def _init():
            acc_ref[...] = jnp.zeros_like(acc_ref)

        # logits[q, m]: class-major so each head's CE is lane-dense.
        logits = jax.lax.dot_general(
            w_ref[...], x_ref[...],
            dimension_numbers=(((1,), (1,)), ((), ())),
            preferred_element_type=jnp.float32)            # [4, tile_m]
        logits = logits + b_ref[:, 0:1]

        l0 = logits[0:2, :]                                 # class-0: (break, start)
        l1 = logits[2:4, :]                                 # class-1: (break, start)
        t = t_ref[...]                                      # [2, tile_m]
        d = l1 - l0
        # 2-class logsumexp; arg of log is in (1, 2] -> numerically == log1p form.
        lse = jnp.maximum(l0, l1) + jnp.log(1.0 + jnp.exp(-jnp.abs(d)))
        nll = lse - (l0 + t * d)
        wt = 1.0 + 9.0 * t                                  # class weights [1, 10]

        # Ragged-tail / overhang mask (unclamped tile index -> fully masked
        # when this (core, step) has no real tile).
        tile_idx = c * tiles_per_core + i
        col = tile_idx * tile_m + jax.lax.broadcasted_iota(
            jnp.int32, (1, tile_m), 1)
        valid = col < total_tokens                          # [1, tile_m]

        acc_ref[0:2, :] += jnp.where(valid, wt * nll, 0.0)  # numerators
        acc_ref[2:4, :] += jnp.where(valid, wt, 0.0)        # denominators

        @pl.when(i == pl.num_programs(1) - 1)
        def _finalize():
            sums = jnp.sum(acc_ref[...], axis=1, keepdims=True)   # [8, 1]
            out_ref[...] = jnp.broadcast_to(sums, (8, 128))
    return kernel


# ---------------------------------------------------------------------------
# Wrapper
# ---------------------------------------------------------------------------
def segment_losses_pallas(word_embeddings, targets, w_t, b_full, *,
                          tile_m=None, num_cores=1):
    """Returns (loss_break, loss_start): the two weighted-mean CE losses."""
    num_tokens, hidden = word_embeddings.shape
    vmem_limit = _vmem_limit_bytes()
    if tile_m is None:
        tile_m = _choose_tile_m(num_tokens, hidden,
                                jnp.dtype(word_embeddings.dtype).itemsize,
                                vmem_limit)
    else:
        tile_m = max(128, pl.cdiv(int(tile_m), 128) * 128)
    if tile_m >= num_tokens:
        tile_m = num_tokens                 # single full-array block

    total_tiles = pl.cdiv(num_tokens, tile_m)
    tiles_per_core = pl.cdiv(total_tiles, num_cores)
    last_tile = total_tiles - 1

    def x_map(c, i):
        return (jnp.minimum(c * tiles_per_core + i, last_tile), 0)

    def t_map(c, i):
        return (0, jnp.minimum(c * tiles_per_core + i, last_tile))

    partials = pl.pallas_call(
        _make_segment_loss_kernel(num_tokens, tile_m, tiles_per_core),
        out_shape=jax.ShapeDtypeStruct((num_cores, 8, 128), jnp.float32),
        grid_spec=pltpu.PrefetchScalarGridSpec(
            num_scalar_prefetch=0,
            grid=(num_cores, tiles_per_core),
            in_specs=[
                pl.BlockSpec((tile_m, hidden), x_map),      # x  (streamed)
                pl.BlockSpec((2, tile_m), t_map),           # targets [2, T]
                pl.BlockSpec((4, hidden), lambda c, i: (0, 0)),   # fused weights
                pl.BlockSpec((4, 128), lambda c, i: (0, 0)),      # fused biases
            ],
            out_specs=pl.BlockSpec((None, 8, 128), lambda c, i: (c, 0, 0)),
            scratch_shapes=[pltpu.VMEM((8, tile_m), jnp.float32)],
        ),
        compiler_params=pltpu.CompilerParams(
            dimension_semantics=("parallel", "arbitrary"),
            vmem_limit_bytes=int(vmem_limit)),
    )(word_embeddings, targets, w_t, b_full)

    sums = jnp.sum(partials[:, :, 0], axis=0)       # (8,), rows 0-3 meaningful
    loss_break = sums[0] / sums[2]
    loss_start = sums[1] / sums[3]
    return loss_break, loss_start


class LinearSegmenterPallas:
    """JAX/Pallas port of LinearSegmenter (train_segment_loss path)."""

    def __init__(self, hidden_size, key, if_edu_start_loss=True):
        self.hidden_size = hidden_size
        self.if_edu_start_loss = if_edu_start_loss
        k1, k2 = jax.random.split(key, 2)
        # nn.init.uniform_(weight, -0.005, 0.005); bias = 0.
        # Stored as [H, 2] (transposed vs. torch's [2, H]).
        self.w_break = jax.random.uniform(k1, (hidden_size, 2), jnp.float32,
                                          minval=-0.005, maxval=0.005)
        self.b_break = jnp.zeros((2,), jnp.float32)
        self.w_start = jax.random.uniform(k2, (hidden_size, 2), jnp.float32,
                                          minval=-0.005, maxval=0.005)
        self.b_start = jnp.zeros((2,), jnp.float32)

        # Fused head matrix, class-major rows: [break_c0, start_c0, break_c1, start_c1].
        w_t = jnp.stack([self.w_break[:, 0], self.w_start[:, 0],
                         self.w_break[:, 1], self.w_start[:, 1]], axis=0)   # [4, H]
        self.w_t_f32 = w_t
        self.w_t_bf16 = w_t.astype(jnp.bfloat16)   # cast ONCE (MXU-native bf16 path)
        b_vec = jnp.stack([self.b_break[0], self.b_start[0],
                           self.b_break[1], self.b_start[1]])
        self.b_full = jnp.tile(b_vec[:, None], (1, 128)).astype(jnp.float32)

    def _build_targets(self, num_tokens, edu_breaks):
        """[2, T] f32 indicators (row 0 break, row 1 start), built on device."""
        br = jnp.asarray(list(edu_breaks), dtype=jnp.int32)
        break_ind = jnp.zeros((num_tokens,), jnp.float32).at[br].set(1.0)
        start_ind = jnp.zeros((num_tokens,), jnp.float32).at[0].set(1.0)
        start_ind = start_ind.at[br[:-1] + 1].set(1.0)
        return jnp.stack([break_ind, start_ind], axis=0)

    def train_segment_loss(self, word_embeddings, edu_breaks, *,
                           tile_m=None, num_cores=1):
        # TODO(synk): dropout(p=0.5) is identity (eval mode); training-mode dropout
        #             would need pltpu.prng_* inside the kernel.
        num_tokens = word_embeddings.shape[0]
        targets = self._build_targets(num_tokens, edu_breaks)
        w = self.w_t_bf16 if word_embeddings.dtype == jnp.bfloat16 else self.w_t_f32
        loss_break, loss_start = segment_losses_pallas(
            word_embeddings, targets, w, self.b_full,
            tile_m=tile_m, num_cores=num_cores)
        if self.if_edu_start_loss:
            return loss_break + loss_start
        # Single-head path: the second head was just 2 extra rows of the same
        # fused matmul, so there is no duplicated work to discard.
        return loss_break


# ---------------------------------------------------------------------------
# Pure-JAX reference (matches torch.nn.CrossEntropyLoss(weight=[1, 10]))
# ---------------------------------------------------------------------------
def _reference_loss(x, w_break, b_break, w_start, b_start, edu_breaks,
                    if_edu_start_loss=True):
    T = x.shape[0]
    t_break = np.zeros((T,), np.int32)
    t_start = np.zeros((T,), np.int32)
    for i in edu_breaks:
        t_break[i] = 1
    t_start[0] = 1
    for i in edu_breaks[:-1]:
        t_start[i + 1] = 1

    cw = jnp.array([1.0, 10.0], jnp.float32)
    x = x.astype(jnp.float32)

    def ce(logits, t):
        lse = jax.scipy.special.logsumexp(logits, axis=-1)
        picked = jnp.take_along_axis(logits, t[:, None], axis=-1)[:, 0]
        nll = lse - picked
        wt = cw[t]
        return jnp.sum(wt * nll) / jnp.sum(wt)

    loss = ce(jnp.dot(x, w_break, precision="highest") + b_break,
              jnp.asarray(t_break))
    if if_edu_start_loss:
        loss = loss + ce(jnp.dot(x, w_start, precision="highest") + b_start,
                         jnp.asarray(t_start))
    return loss


if __name__ == "__main__":
    key = jax.random.PRNGKey(0)
    k_param, k_x1, k_x2 = jax.random.split(key, 3)

    hidden = 32
    model = LinearSegmenterPallas(hidden_size=hidden, key=k_param)

    # ---- case 1: tiny sequence, auto tile (single full-array block) ----
    seq1, breaks1 = 8, [2, 5, 7]
    x1 = jax.random.normal(k_x1, (seq1, hidden), jnp.float32)
    loss1 = jax.block_until_ready(model.train_segment_loss(x1, breaks1))
    ref1 = _reference_loss(x1, model.w_break, model.b_break,
                           model.w_start, model.b_start, breaks1)
    assert np.allclose(np.asarray(loss1), np.asarray(ref1),
                       rtol=1e-3, atol=1e-3), (loss1, ref1)

    # ---- case 2: multi-tile grid with ragged tail, no wrapper-side padding ----
    seq2, breaks2 = 150, [10, 40, 77, 120, 149]
    x2 = jax.random.normal(k_x2, (seq2, hidden), jnp.float32)
    loss2 = jax.block_until_ready(
        model.train_segment_loss(x2, breaks2, tile_m=128))
    ref2 = _reference_loss(x2, model.w_break, model.b_break,
                           model.w_start, model.b_start, breaks2)
    assert np.allclose(np.asarray(loss2), np.asarray(ref2),
                       rtol=1e-3, atol=1e-3), (loss2, ref2)

    # ---- case 3: bf16 embeddings + bf16 weights (MXU-native, half the HBM) ----
    loss2_bf16 = jax.block_until_ready(
        model.train_segment_loss(x2.astype(jnp.bfloat16), breaks2, tile_m=128))
    assert abs(float(loss2_bf16) - float(ref2)) < 2e-2, (loss2_bf16, ref2)

    # ---- case 4: two-core sharding path (v7x megacore; serial elsewhere) ----
    loss2_mc = jax.block_until_ready(
        model.train_segment_loss(x2, breaks2, tile_m=128, num_cores=2))
    assert np.allclose(np.asarray(loss2_mc), np.asarray(ref2),
                       rtol=1e-3, atol=1e-3), (loss2_mc, ref2)

    # ---- case 5: single-head path (if_edu_start_loss=False) ----
    model_single = LinearSegmenterPallas(hidden_size=hidden, key=k_param,
                                         if_edu_start_loss=False)
    loss_single = jax.block_until_ready(
        model_single.train_segment_loss(x2, breaks2, tile_m=128))
    ref_single = _reference_loss(x2, model.w_break, model.b_break,
                                 model.w_start, model.b_start, breaks2,
                                 if_edu_start_loss=False)
    assert np.allclose(np.asarray(loss_single), np.asarray(ref_single),
                       rtol=1e-3, atol=1e-3), (loss_single, ref_single)

    print("KERNEL_OK")
</pallas_src>

<mosaic_0001>
module attributes {stable_mosaic.version = 11 : i64} {
  func.func @kernel(%arg0: i32, %arg1: i32, %arg2: memref<8x32xf32, #tpu.memory_space<vmem>>, %arg3: memref<2x8xf32, #tpu.memory_space<vmem>>, %arg4: memref<4x32xf32, #tpu.memory_space<vmem>>, %arg5: memref<4x128xf32, #tpu.memory_space<vmem>>, %arg6: memref<1x8x128xf32, #tpu.memory_space<vmem>>, %arg7: memref<8x8xf32, #tpu.memory_space<vmem>>) attributes {dimension_semantics = [#tpu.dimension_semantics<parallel>, #tpu.dimension_semantics<arbitrary>], iteration_bounds = array<i64: 1, 1>, scalar_prefetch = 0 : i64, scratch_operands = 1 : i64, tpu.core_type = #tpu.core_type<tc>, window_params = [{transform_indices = @transform_0, window_bounds = array<i64: 8, 32>}, {transform_indices = @transform_1, window_bounds = array<i64: 2, 8>}, {pipeline_mode = #tpu.pipeline_mode<synchronous>, transform_indices = @transform_2, window_bounds = array<i64: 4, 32>}, {pipeline_mode = #tpu.pipeline_mode<synchronous>, transform_indices = @transform_3, window_bounds = array<i64: 4, 128>}, {transform_indices = @transform_4, window_bounds = array<i64: 1, 8, 128>}]} {
    %c0_i32 = arith.constant 0 : i32
    %0 = arith.cmpi eq, %arg1, %c0_i32 : i32
    %1 = arith.extui %0 : i1 to i32
    %c0_i32_0 = arith.constant 0 : i32
    %2 = arith.cmpi ne, %1, %c0_i32_0 : i32
    scf.if %2 {
      %cst_24 = arith.constant 0.000000e+00 : f32
      %55 = vector.broadcast %cst_24 : f32 to vector<8x8xf32>
      %c0_25 = arith.constant 0 : index
      %c0_26 = arith.constant 0 : index
      %56 = vector.load %arg7[%c0_25, %c0_26] : memref<8x8xf32, #tpu.memory_space<vmem>>, vector<8x8xf32>
      tpu.vector_store %arg7[%c0_25, %c0_26], %55 {strides = array<i32>} : memref<8x8xf32, #tpu.memory_space<vmem>>, vector<8x8xf32>,
    } else {
    }
    %c0 = arith.constant 0 : index
    %c0_1 = arith.constant 0 : index
    %3 = vector.load %arg4[%c0, %c0_1] : memref<4x32xf32, #tpu.memory_space<vmem>>, vector<4x32xf32>
    %c0_2 = arith.constant 0 : index
    %c0_3 = arith.constant 0 : index
    %4 = vector.load %arg2[%c0_2, %c0_3] : memref<8x32xf32, #tpu.memory_space<vmem>>, vector<8x32xf32>
    %cst = arith.constant dense<0.000000e+00> : vector<4x8xf32>
    %5 = tpu.matmul %3, %4, %cst {dimension_numbers = #tpu.dot_dimension_numbers<[1], [1], [0], [0], [0, 0, 1, 0], [], []>} : vector<4x32xf32>, vector<8x32xf32>, vector<4x8xf32> -> vector<4x8xf32>
    %c0_4 = arith.constant 0 : index
    %c0_5 = arith.constant 0 : index
    %6 = vector.load %arg5[%c0_4, %c0_5] : memref<4x128xf32, #tpu.memory_space<vmem>>, vector<4x1xf32>
    %7 = vector.broadcast %6 : vector<4x1xf32> to vector<4x8xf32>
    %8 = arith.addf %5, %7 : vector<4x8xf32>
    %9 = vector.extract_strided_slice %8 {offsets = [0, 0], sizes = [2, 8], strides = [1, 1]} : vector<4x8xf32> to vector<2x8xf32>
    %10 = vector.extract_strided_slice %8 {offsets = [2, 0], sizes = [2, 8], strides = [1, 1]} : vector<4x8xf32> to vector<2x8xf32>
    %c0_6 = arith.constant 0 : index
    %c0_7 = arith.constant 0 : index
    %11 = vector.load %arg3[%c0_6, %c0_7] : memref<2x8xf32, #tpu.memory_space<vmem>>, vector<2x8xf32>
    %12 = arith.subf %10, %9 : vector<2x8xf32>
    %13 = arith.maximumf %9, %10 : vector<2x8xf32>
    %14 = math.absf %12 : vector<2x8xf32>
    %cst_8 = arith.constant 0.000000e+00 : f32
    %15 = vector.broadcast %cst_8 : f32 to vector<2x8xf32>
    %16 = arith.subf %15, %14 : vector<2x8xf32>
    %17 = math.exp %16 : vector<2x8xf32>
    %cst_9 = arith.constant 1.000000e+00 : f32
    %18 = vector.broadcast %cst_9 : f32 to vector<2x8xf32>
    %19 = arith.addf %18, %17 : vector<2x8xf32>
    %20 = math.log %19 : vector<2x8xf32>
    %21 = arith.addf %13, %20 : vector<2x8xf32>
    %22 = arith.mulf %11, %12 : vector<2x8xf32>
    %23 = arith.addf %9, %22 : vector<2x8xf32>
    %24 = arith.subf %21, %23 : vector<2x8xf32>
    %cst_10 = arith.constant 9.000000e+00 : f32
    %25 = vector.broadcast %cst_10 : f32 to vector<2x8xf32>
    %26 = arith.mulf %25, %11 : vector<2x8xf32>
    %cst_11 = arith.constant 1.000000e+00 : f32
    %27 = vector.broadcast %cst_11 : f32 to vector<2x8xf32>
    %28 = arith.addf %27, %26 : vector<2x8xf32>
    %c1_i32 = arith.constant 1 : i32
    %29 = arith.muli %arg0, %c1_i32 : i32
    %30 = arith.addi %29, %arg1 : i32
    %c8_i32 = arith.constant 8 : i32
    %31 = arith.muli %30, %c8_i32 : i32
    %32 = tpu.iota {dimensions = array<i32: 1>} : vector<1x8xi32>
    %33 = vector.broadcast %31 : i32 to vector<1x8xi32>
    %34 = arith.addi %33, %32 : vector<1x8xi32>
    %c8_i32_12 = arith.constant 8 : i32
    %35 = vector.broadcast %c8_i32_12 : i32 to vector<1x8xi32>
    %36 = arith.cmpi slt, %34, %35 : vector<1x8xi32>
    %c0_13 = arith.constant 0 : index
    %c0_14 = arith.constant 0 : index
    %37 = vector.load %arg7[%c0_13, %c0_14] : memref<8x8xf32, #tpu.memory_space<vmem>>, vector<2x8xf32>
    %38 = arith.mulf %28, %24 : vector<2x8xf32>
    %cst_15 = arith.constant 0.000000e+00 : f32
    %39 = vector.shape_cast %36 : vector<1x8xi1> to vector<1x8xi1>
    %40 = vector.broadcast %39 : vector<1x8xi1> to vector<2x8xi1>
    %41 = vector.broadcast %cst_15 : f32 to vector<2x8xf32>
    %42 = arith.select %40, %38, %41 : vector<2x8xi1>, vector<2x8xf32>
    %43 = arith.addf %37, %42 : vector<2x8xf32>
    %c0_16 = arith.constant 0 : index
    %c0_17 = arith.constant 0 : index
    %44 = vector.load %arg7[%c0_16, %c0_17] : memref<8x8xf32, #tpu.memory_space<vmem>>, vector<2x8xf32>
    tpu.vector_store %arg7[%c0_16, %c0_17], %43 {strides = array<i32>} : memref<8x8xf32, #tpu.memory_space<vmem>>, vector<2x8xf32>,
    %c2 = arith.constant 2 : index
    %c0_18 = arith.constant 0 : index
    %45 = vector.load %arg7[%c2, %c0_18] : memref<8x8xf32, #tpu.memory_space<vmem>>, vector<2x8xf32>
    %cst_19 = arith.constant 0.000000e+00 : f32
    %46 = vector.shape_cast %36 : vector<1x8xi1> to vector<1x8xi1>
    %47 = vector.broadcast %46 : vector<1x8xi1> to vector<2x8xi1>
    %48 = vector.broadcast %cst_19 : f32 to vector<2x8xf32>
    %49 = arith.select %47, %28, %48 : vector<2x8xi1>, vector<2x8xf32>
    %50 = arith.addf %45, %49 : vector<2x8xf32>
    %c2_20 = arith.constant 2 : index
    %c0_21 = arith.constant 0 : index
    %51 = vector.load %arg7[%c2_20, %c0_21] : memref<8x8xf32, #tpu.memory_space<vmem>>, vector<2x8xf32>
    tpu.vector_store %arg7[%c2_20, %c0_21], %50 {strides = array<i32>} : memref<8x8xf32, #tpu.memory_space<vmem>>, vector<2x8xf32>,
    %c0_i32_22 = arith.constant 0 : i32
    %52 = arith.cmpi eq, %arg1, %c0_i32_22 : i32
    %53 = arith.extui %52 : i1 to i32
    %c0_i32_23 = arith.constant 0 : i32
    %54 = arith.cmpi ne, %53, %c0_i32_23 : i32
    scf.if %54 {
      %c0_24 = arith.constant 0 : index
      %c0_25 = arith.constant 0 : index
      %55 = vector.load %arg7[%c0_24, %c0_25] : memref<8x8xf32, #tpu.memory_space<vmem>>, vector<8x8xf32>
      %cst_26 = arith.constant dense<0.000000e+00> : vector<8xf32>
      %56 = vector.multi_reduction <add>, %55, %cst_26 [1] : vector<8x8xf32> to vector<8xf32>
      %57 = vector.shape_cast %56 : vector<8xf32> to vector<8x1xf32>
      %58 = vector.shape_cast %57 : vector<8x1xf32> to vector<8x1xf32>
      %59 = vector.broadcast %58 : vector<8x1xf32> to vector<8x128xf32>
      %c0_27 = arith.constant 0 : index
      %c0_28 = arith.constant 0 : index
      %c0_29 = arith.constant 0 : index
      %60 = vector.load %arg6[%c0_27, %c0_28, %c0_29] : memref<1x8x128xf32, #tpu.memory_space<vmem>>, vector<1x8x128xf32>
      %61 = vector.shape_cast %60 : vector<1x8x128xf32> to vector<8x128xf32>
      %62 = vector.shape_cast %59 : vector<8x128xf32> to vector<1x8x128xf32>
      tpu.vector_store %arg6[%c0_27, %c0_28, %c0_29], %62 {strides = array<i32>} : memref<1x8x128xf32, #tpu.memory_space<vmem>>, vector<1x8x128xf32>,
    } else {
    }
    return
  }
  func.func @transform_0(%arg0: i32, %arg1: i32) -> (i32, i32) {
    %c1_i32 = arith.constant 1 : i32
    %0 = arith.muli %arg0, %c1_i32 : i32
    %1 = arith.addi %0, %arg1 : i32
    %c0_i32 = arith.constant 0 : i32
    %2 = arith.minsi %1, %c0_i32 : i32
    %c0_i32_0 = arith.constant 0 : i32
    %c0_i32_1 = arith.constant 0 : i32
    return %2, %c0_i32_0 : i32, i32
  }
  func.func @transform_1(%arg0: i32, %arg1: i32) -> (i32, i32) {
    %c1_i32 = arith.constant 1 : i32
    %0 = arith.muli %arg0, %c1_i32 : i32
    %1 = arith.addi %0, %arg1 : i32
    %c0_i32 = arith.constant 0 : i32
    %2 = arith.minsi %1, %c0_i32 : i32
    %c0_i32_0 = arith.constant 0 : i32
    %c0_i32_1 = arith.constant 0 : i32
    return %c0_i32_0, %2 : i32, i32
  }
  func.func @transform_2(%arg0: i32, %arg1: i32) -> (i32, i32) {
    %c0_i32 = arith.constant 0 : i32
    %c0_i32_0 = arith.constant 0 : i32
    %c0_i32_1 = arith.constant 0 : i32
    return %c0_i32, %c0_i32_0 : i32, i32
  }
  func.func @transform_3(%arg0: i32, %arg1: i32) -> (i32, i32) {
    %c0_i32 = arith.constant 0 : i32
    %c0_i32_0 = arith.constant 0 : i32
    %c0_i32_1 = arith.constant 0 : i32
    return %c0_i32, %c0_i32_0 : i32, i32
  }
  func.func @transform_4(%arg0: i32, %arg1: i32) -> (i32, i32, i32) {
    %c0_i32 = arith.constant 0 : i32
    %c0_i32_0 = arith.constant 0 : i32
    %c0_i32_1 = arith.constant 0 : i32
    return %arg0, %c0_i32, %c0_i32_0 : i32, i32, i32
  }
}

</mosaic_0001>

<llo_original>
// kernel: tpu_custom_call.1
$region0: #{tpu_custom_call.1}
  #allocation0 [shape = 'u32[]', space=smem, size = 0x4, offset = 0x4, fixed_abs, tag = 'smem constant byte address 0x4 - core index']
  #allocation1 [shape = 'u32[72,128]{1,0:T(1,128)}', space=vmem, size = 0x9000, scoped, tag = 'internal scratch']
  #allocation2 [shape = 'f32[8,8]{1,0:T(8,128)}', space=vmem, size = 0x1000, scoped, tag = 'scratch operand']
  %s0 = inlined_call_operand.hbm [shape: f32[8,32], index: 0, kind: input, shape index: {}]
  %s1 = inlined_call_operand.hbm [shape: f32[2,8], index: 1, kind: input, shape index: {}]
  %s2 = inlined_call_operand.hbm [shape: f32[4,32], index: 2, kind: input, shape index: {}]
  %s3 = inlined_call_operand.hbm [shape: f32[4,128], index: 3, kind: input, shape index: {}]
  %s4 = inlined_call_operand.hbm [shape: f32[1,8,128], index: 4, kind: output, shape index: {}]
  %s5 = sld [smem:[#allocation0]]
  $region50: #{tpu_custom_call.1} parent=0
    _
  %s7 = ssub.s32 1, %s5
  %s8 = scalar_select 0, %s7, %s5
  $region1: #{tpu_custom_call.1} parent=0
    #allocation3 [shape = 'u8[4096]{0}', space=vmem, size = 0x1000, scoped, tag = 'input window, operand 0, single buffered']
    #allocation4 [shape = 's32[1]{0}', space=sflag, size = 0x4, scoped, tag = 'scoped memory for tpu_custom_call.1']
    #allocation5 [shape = 's32[1]{0}', space=sflag, size = 0x4, scoped, tag = 'scoped memory for tpu_custom_call.1']
    #allocation6 [shape = 'u8[1024]{0}', space=vmem, size = 0x400, scoped, tag = 'input window, operand 1, single buffered']
    #allocation7 [shape = 's32[1]{0}', space=sflag, size = 0x4, scoped, tag = 'scoped memory for tpu_custom_call.1']
    #allocation8 [shape = 'u8[2048]{0}', space=vmem, size = 0x800, scoped, tag = 'input window, operand 2, single buffered']
    #allocation9 [shape = 'u8[2048]{0}', space=vmem, size = 0x800, scoped, tag = 'input window, operand 3, single buffered']
    #allocation10 [shape = 's32[1]{0}', space=sflag, size = 0x4, scoped, tag = 'scoped memory for tpu_custom_call.1']
    #allocation11 [shape = 'u8[4096]{0}', space=vmem, size = 0x1000, scoped, tag = 'output window, operand 0, single buffered']
    %9 = vsyncpa [#allocation4], 0
    %10 = vsyncpa [#allocation7], 0
    %11 = vsyncpa [#allocation10], 0
    %12 = vsyncpa [#allocation5], 0
    // Predicated region
    $region2: #{tpu_custom_call.1} parent=1 // pred_check
      _
    $region3: #{tpu_custom_call.1} parent=1 // pred_check_branch
      %14 = sbr.rel (0) target = $region5
    $region4: #{tpu_custom_call.1} parent=1 // pred_region
      %s15 = sadd.s32 0, 0
      %p16 = scmp.lt.s32.totalorder %s15, 0
      %s17 = scalar_select %p16, %s15, 0
      %19 = vsyncadd [#allocation4], 0
      %s20 = smul.addr %s17, 8
      %s21 = scalar_lea.hbm %s0, %s20
      %s23 = sshll.u32 %s21, 4
      %s24 = int_to_ptr.hbm [resolvable:$true] %s23
      %s25 = sshll.u32 [#allocation3], 4
      %s26 = int_to_ptr.vmem [resolvable:$true] %s25
      %28 = dma.hbm_to_vmem [thread:$0]  %s24, 128, %s26, [#allocation4]
    $region5: #{tpu_custom_call.1} parent=1 // pred_fallthru
      _
    // Predicated region
    $region6: #{tpu_custom_call.1} parent=1 // pred_check
      _
    $region7: #{tpu_custom_call.1} parent=1 // pred_check_branch
      %30 = sbr.rel (0) target = $region9
    $region8: #{tpu_custom_call.1} parent=1 // pred_region
      %s31 = sadd.s32 0, 0
      %p32 = scmp.lt.s32.totalorder %s31, 0
      %s33 = scalar_select %p32, %s31, 0
      %35 = vsyncadd [#allocation7], 0
      %s36 = smul.addr %s33, 2
      %s37 = scalar_lea.hbm %s1, %s36
      %s39 = sshll.u32 %s37, 4
      %s40 = int_to_ptr.hbm [resolvable:$true] %s39
      %s41 = sshll.u32 [#allocation6], 4
      %s42 = int_to_ptr.vmem [resolvable:$true] %s41
      %44 = dma.hbm_to_vmem [thread:$0]  %s40, 32, %s42, [#allocation7]
    $region9: #{tpu_custom_call.1} parent=1 // pred_fallthru
      _
    // Predicated region
    $region10: #{tpu_custom_call.1} parent=1 // pred_check
      _
    $region11: #{tpu_custom_call.1} parent=1 // pred_check_branch
      %46 = sbr.rel (0) target = $region13
    $region12: #{tpu_custom_call.1} parent=1 // pred_region
      %48 = vsyncadd [#allocation7], 0
      %s50 = sshll.u32 %s2, 4
      %s51 = int_to_ptr.hbm [resolvable:$true] %s50
      %s52 = sshll.u32 [#allocation8], 4
      %s53 = int_to_ptr.vmem [resolvable:$true] %s52
      %55 = dma.hbm_to_vmem [thread:$0]  %s51, 64, %s53, [#allocation7]
    $region13: #{tpu_custom_call.1} parent=1 // pred_fallthru
      _
    // Predicated region
    $region14: #{tpu_custom_call.1} parent=1 // pred_check
      _
    $region15: #{tpu_custom_call.1} parent=1 // pred_check_branch
      %57 = sbr.rel (0) target = $region17
    $region16: #{tpu_custom_call.1} parent=1 // pred_region
      %59 = vsyncadd [#allocation10], 0
      %s61 = sshll.u32 %s3, 4
      %s62 = int_to_ptr.hbm [resolvable:$true] %s61
      %s63 = sshll.u32 [#allocation9], 4
      %s64 = int_to_ptr.vmem [resolvable:$true] %s63
      %66 = dma.hbm_to_vmem [thread:$0]  %s62, 64, %s64, [#allocation10]
    $region17: #{tpu_custom_call.1} parent=1 // pred_fallthru
      _
    // Predicated region
    $region18: #{tpu_custom_call.1} parent=1 // pred_check
      _
    $region19: #{tpu_custom_call.1} parent=1 // pred_check_branch
      %68 = sbr.rel (0) target = $region21
    $region20: #{tpu_custom_call.1} parent=1 // pred_region
      %70 = dma.done [#allocation4], 128
    $region21: #{tpu_custom_call.1} parent=1 // pred_fallthru
      _
    // Predicated region
    $region22: #{tpu_custom_call.1} parent=1 // pred_check
      _
    $region23: #{tpu_custom_call.1} parent=1 // pred_check_branch
      %72 = sbr.rel (0) target = $region25
    $region24: #{tpu_custom_call.1} parent=1 // pred_region
      %74 = dma.done [#allocation7], 32
    $region25: #{tpu_custom_call.1} parent=1 // pred_fallthru
      _
    // Predicated region
    $region26: #{tpu_custom_call.1} parent=1 // pred_check
      _
    $region27: #{tpu_custom_call.1} parent=1 // pred_check_branch
      %76 = sbr.rel (0) target = $region29
    $region28: #{tpu_custom_call.1} parent=1 // pred_region
      %78 = dma.done [#allocation7], 64
    $region29: #{tpu_custom_call.1} parent=1 // pred_fallthru
      _
    // Predicated region
    $region30: #{tpu_custom_call.1} parent=1 // pred_check
      _
    $region31: #{tpu_custom_call.1} parent=1 // pred_check_branch
      %80 = sbr.rel (0) target = $region33
    $region32: #{tpu_custom_call.1} parent=1 // pred_region
      %82 = dma.done [#allocation10], 64
    $region33: #{tpu_custom_call.1} parent=1 // pred_fallthru
      _
    %s83 = sadd.s32 0, 0
    %p84 = scmp.lt.s32.totalorder %s83, 0
    %s85 = scalar_select %p84, %s83, 0
    %s86 = sadd.s32 0, 0
    %p87 = scmp.lt.s32.totalorder %s86, 0
    %s88 = scalar_select %p87, %s86, 0
    %p89 = scmp.eq.s32.totalorder 0, 0
    // Predicated region
    $region34: #{tpu_custom_call.1} parent=1 // pred_check
      %p90 = pneg %p89
    $region35: #{tpu_custom_call.1} parent=1 // pred_check_branch
      %92 = sbr.rel (%p90) target = $region37
    $region36: #{tpu_custom_call.1} parent=1 // pred_region
      %vm93 = vcmask 64512
      %94 = vst.msk [vmem:[#allocation2] sm:$0xff] %vm93, 0.0
    $region37: #{tpu_custom_call.1} parent=1 // pred_fallthru
      _
    %v95 = vld [vmem:[#allocation8] sm:$0xf]
    %v96 = vld [vmem:[#allocation3] sm:$0xff]
    %v97 = vld [vmem:[#allocation9] sm:$0xf]
    %99 = vset.pattern.permute.xlu0 0
    %100 = vperm.xlu0 %99, %v97
    %v101 = vpop.permute.xlu0 %100
    %vm103 = vcmask 261120
    %v105 = vsel %vm103, %v95, 0
    %v108 = vsel %vm103, %v96, 0
    %110 = vmatpush.xpose.msra.mxu0 0.0
    %111 = vmatpush.xpose.msra.mxu0 0.0
    %112 = vmatpush.xpose.msra.mxu0 0.0
    %113 = vmatpush.xpose.msra.mxu0 0.0
    %114 = vmatpush.xpose.msra.mxu0 0.0
    %115 = vmatpush.xpose.msra.mxu0 0.0
    %116 = vmatpush.xpose.msra.mxu0 0.0
    %117 = vmatpush.xpose.msra.mxu0 0.0
    %118 = vmatpush.xpose.msra.mxu0 0.0
    %119 = vmatpush.xpose.msra.mxu0 0.0
    %120 = vmatpush.xpose.msra.mxu0 0.0
    %121 = vmatpush.xpose.msra.mxu0 0.0
    %122 = vmatpush.xpose.msra.mxu0 0.0
    %123 = vmatpush.xpose.msra.mxu0 0.0
    %124 = vmatpush.xpose.msra.mxu0 0.0
    %125 = vmatpush.xpose.msra.mxu0 %v108
    %126 = vmatmul.f32.gmra.mxu0 %v105
    %v127 = vpop.f32.mrf.mxu0
    %v128 = vadd.f32 %v101, %v127
    %129 = vdwg.mxu0
    %v130 = vld [vmem:[#allocation6] sm:$0x3]
    %v132 = vrot.slane %v128, 6
    %v134 = vsub.f32 %v128, %v132
    %v135 = vrot.slane %v128, 2
    %v137 = vmax.f32 %v128, %v135
    %v138 = vand.u32 2147483647, %v134
    %v139 = vsub.f32 0.0, %v138
    %v140 = vmul.f32 %v139, 1.442695
    %v141 = vpow.pop %v140
    %v142 = vadd.f32 %v141, 1.0
    %v143 = vlog2.pop %v142
    %v144 = vmul.f32 %v143, 0.6931472
    %v146 = vrot.slane %v144, 2
    %v148 = vadd.f32 %v137, %v146
    %v150 = vrot.slane %v134, 2
    %v152 = vmul.f32 %v130, %v150
    %v153 = vadd.f32 %v128, %v152
    %v154 = vsub.f32 %v148, %v153
    %v155 = vmul.f32 %v130, 9.0
    %v156 = vadd.f32 %v155, 1.0
    %s157 = sadd.s32 0, 0
    %s158 = smul.u32 %s157, 8
    %v159 = vlaneseq
    %v160 = vand.u32 %v159, 127
    %v161 = vstv %s158
    %v162 = vadd.s32 %v161, %v160
    %vm163 = vcmp.lt.s32.totalorder %v162, 8
    %v164 = vld [vmem:[#allocation2] sm:$0x3]
    %v165 = vmul.f32 %v156, %v154
    %v166 = vsel %vm163, 1, 0
    %vm167 = vcmp.eq.s32.totalorder %v166, 1
    %v168 = vsel %vm167, %v165, 0.0
    %v169 = vadd.f32 %v164, %v168
    %vm170 = vcmask 58368
    %171 = vst.msk [vmem:[#allocation2] sm:$0x3] %vm170, %v169
    %v172 = vld [vmem:[#allocation2 + $0x2] sm:$0x3]
    %v173 = vsel %vm167, %v156, 0.0
    %v174 = vadd.f32 %v172, %v173
    %175 = vst.msk [vmem:[#allocation2 + $0x2] sm:$0x3] %vm170, %v174
    // Predicated region
    $region38: #{tpu_custom_call.1} parent=1 // pred_check
      %p176 = pneg %p89
    $region39: #{tpu_custom_call.1} parent=1 // pred_check_branch
      %178 = sbr.rel (%p176) target = $region41
    $region40: #{tpu_custom_call.1} parent=1 // pred_region
      %v179 = vld [vmem:[#allocation2] sm:$0xff]
      %vm180 = vcmask 64512
      %v181 = vsel %vm180, %v179, 0.0
      %182 = vadd.xlane.f32.xlu0 %v181
      %v183 = vpop.xlane.xlu0 %182
      %184 = vst [vmem:[#allocation11] sm:$0xff] %v183
    $region41: #{tpu_custom_call.1} parent=1 // pred_fallthru
      _
    // Predicated region
    $region42: #{tpu_custom_call.1} parent=1 // pred_check
      _
    $region43: #{tpu_custom_call.1} parent=1 // pred_check_branch
      %186 = sbr.rel (0) target = $region45
    $region44: #{tpu_custom_call.1} parent=1 // pred_region
      %188 = vsyncadd [#allocation5], 0
      %s190 = sshll.u32 [#allocation11], 4
      %s191 = int_to_ptr.vmem [resolvable:$true] %s190
      %s192 = sshll.u32 %s4, 4
      %s193 = int_to_ptr.hbm [resolvable:$true] %s192
      %195 = dma.vmem_to_hbm [thread:$0]  %s191, 128, %s193, [#allocation5]
    $region45: #{tpu_custom_call.1} parent=1 // pred_fallthru
      _
    // Predicated region
    $region46: #{tpu_custom_call.1} parent=1 // pred_check
      _
    $region47: #{tpu_custom_call.1} parent=1 // pred_check_branch
      %197 = sbr.rel (0) target = $region49
    $region48: #{tpu_custom_call.1} parent=1 // pred_region
      %199 = dma.done [#allocation5], 128
    $region49: #{tpu_custom_call.1} parent=1 // pred_fallthru
      _
    %200 = vsyncpa [#allocation4], 1
    %201 = vsyncpa [#allocation7], 1
    %202 = vsyncpa [#allocation10], 1
    %203 = vsyncpa [#allocation5], 1

</llo_original>
